<compile_context>
chip_gen: v6e
topology: v6e:2x2x1
jax: 0.10.0
libtpu: 0.0.40
codegen_flags: <defaults>
</compile_context>

<pallas_src>
import functools

import jax
import jax.numpy as jnp
from jax.experimental import pallas as pl
from jax.experimental.pallas import tpu as pltpu

SIGMA = 25.0  # VE-SDE noise scale for marginal_prob_std


def _score_kernel(rcp_std_ref, w_ref, b_ref, x_ref, o_ref):
    """Fused 1x1-conv (channel-mixing matmul) + bias + per-batch std scaling.

    rcp_std_ref: (N,)        SMEM, 1/marginal_prob_std(t) per batch element
    w_ref:       (Cout, Cin) VMEM, transposed 1x1-conv weight
    b_ref:       (Cout, 1)   VMEM, bias (broadcast over lanes)
    x_ref:       (Cin, TS)   VMEM, spatial tile of one batch element (lane-dense)
    o_ref:       (Cout, TS)  VMEM, output tile (lane-dense)
    """
    n = pl.program_id(0)  # batch index
    h = jnp.dot(w_ref[...], x_ref[...], preferred_element_type=jnp.float32)
    scale = rcp_std_ref[n]  # scalar read from SMEM
    o_ref[...] = ((h + b_ref[...]) * scale).astype(o_ref.dtype)


def _round_up(x, m):
    return ((x + m - 1) // m) * m


@functools.partial(jax.jit, static_argnames=("spatial_tile",))
def score_model_forward(x_nchw, t, weight, bias, *, spatial_tile=1024):
    """Forward pass of the concrete score model.

    x_nchw: (N, Cin, H, W) float32
    t:      (N,)           float32 diffusion times in (0, 1]
    weight: (Cin, Cout)    1x1-conv weight
    bias:   (Cout,)
    returns (N, Cout, H, W) float32
    """
    N, Cin, H, W = x_nchw.shape
    Cout = weight.shape[1]
    HW = H * W

    # Spatial tile: multiple of 128 lanes, capped at the (128-rounded) extent.
    ts = min(spatial_tile, _round_up(HW, 128))
    hw_pad = _round_up(HW, ts)

    # No transposes: NCHW is already (N, Cin, spatial) after a free reshape.
    x_flat = x_nchw.reshape(N, Cin, HW).astype(jnp.float32)
    if hw_pad != HW:
        x_flat = jnp.pad(x_flat, ((0, 0), (0, 0), (0, hw_pad - HW)))

    w_t = jnp.transpose(weight).astype(jnp.float32)      # (Cout, Cin)
    b2d = bias.reshape(Cout, 1).astype(jnp.float32)      # (Cout, 1)

    # marginal_prob_std(t) = sqrt((sigma^{2t} - 1) / (2 log sigma)); precompute
    # 1/std once per batch element (tiny (N,) array, lives in SMEM).
    log_sigma = jnp.log(jnp.float32(SIGMA))
    std = jnp.sqrt(
        (jnp.exp(2.0 * t.astype(jnp.float32) * log_sigma) - 1.0) / (2.0 * log_sigma)
    )
    rcp_std = (1.0 / std).astype(jnp.float32)             # (N,)

    grid = (N, hw_pad // ts)

    cost = pl.CostEstimate(
        flops=2 * N * HW * Cin * Cout,
        transcendentals=0,
        bytes_accessed=4 * (N * Cin * HW + N * Cout * HW + Cin * Cout + Cout + N),
    )

    out_flat = pl.pallas_call(
        _score_kernel,
        out_shape=jax.ShapeDtypeStruct((N, Cout, hw_pad), jnp.float32),
        grid_spec=pltpu.PrefetchScalarGridSpec(
            num_scalar_prefetch=1,                         # rcp_std -> SMEM
            grid=grid,
            in_specs=[
                pl.BlockSpec((Cout, Cin), lambda n, s, rcp: (0, 0)),       # weight
                pl.BlockSpec((Cout, 1), lambda n, s, rcp: (0, 0)),         # bias
                pl.BlockSpec((None, Cin, ts), lambda n, s, rcp: (n, 0, s)),  # x tile
            ],
            out_specs=pl.BlockSpec((None, Cout, ts), lambda n, s, rcp: (n, 0, s)),
        ),
        compiler_params=pltpu.CompilerParams(
            dimension_semantics=("parallel", "parallel"),
        ),
        cost_estimate=cost,
    )(rcp_std, w_t, b2d, x_flat)

    if hw_pad != HW:
        out_flat = out_flat[:, :, :HW]
    return out_flat.reshape(N, Cout, H, W)


def _reference(x_nchw, t, weight, bias):
    """Pure-JAX reference for correctness checking."""
    h = jnp.einsum("nchw,cd->ndhw", x_nchw, weight) + bias[None, :, None, None]
    log_sigma = jnp.log(SIGMA)
    std = jnp.sqrt((jnp.exp(2.0 * t * log_sigma) - 1.0) / (2.0 * log_sigma))
    return h / std[:, None, None, None]


if __name__ == "__main__":
    key = jax.random.PRNGKey(0)
    k_x, k_t, k_w, k_b = jax.random.split(key, 4)

    # small shapes consistent with the module: batch=2, in_channels=4, 16x16
    N, Cin, H, W = 2, 4, 16, 16
    Cout = Cin  # out_channels defaults to in_channels

    x = jax.random.normal(k_x, (N, Cin, H, W), dtype=jnp.float32)
    # clamp t away from 0: std(t)->0 as t->0, so 1/std blows up at t~0
    t = jax.random.uniform(k_t, (N,), dtype=jnp.float32, minval=0.05, maxval=1.0)
    weight = 0.1 * jax.random.normal(k_w, (Cin, Cout), dtype=jnp.float32)
    bias = 0.01 * jax.random.normal(k_b, (Cout,), dtype=jnp.float32)

    out = score_model_forward(x, t, weight, bias)
    out = jax.block_until_ready(out)

    ref = _reference(x, t, weight, bias)
    assert out.shape == (N, Cout, H, W)
    assert jnp.allclose(out, ref, atol=1e-5, rtol=1e-5), "mismatch vs reference"

    print("KERNEL_OK")
</pallas_src>

<mosaic_0001>
module attributes {stable_mosaic.version = 11 : i64} {
  func.func @_score_kernel(%arg0: i32, %arg1: i32, %arg2: memref<2xf32, #tpu.memory_space<smem>>, %arg3: memref<4x4xf32, #tpu.memory_space<vmem>>, %arg4: memref<4x1xf32, #tpu.memory_space<vmem>>, %arg5: memref<1x4x256xf32, #tpu.memory_space<vmem>>, %arg6: memref<1x4x256xf32, #tpu.memory_space<vmem>>) attributes {dimension_semantics = [#tpu.dimension_semantics<parallel>, #tpu.dimension_semantics<parallel>], iteration_bounds = array<i64: 2, 1>, scalar_prefetch = 1 : i64, scratch_operands = 0 : i64, tpu.core_type = #tpu.core_type<tc>, window_params = [{pipeline_mode = #tpu.pipeline_mode<synchronous>, transform_indices = @transform_0, window_bounds = array<i64: 4, 4>}, {pipeline_mode = #tpu.pipeline_mode<synchronous>, transform_indices = @transform_1, window_bounds = array<i64: 4, 1>}, {transform_indices = @transform_2, window_bounds = array<i64: 1, 4, 256>}, {transform_indices = @transform_3, window_bounds = array<i64: 1, 4, 256>}]} {
    %c0 = arith.constant 0 : index
    %c0_0 = arith.constant 0 : index
    %0 = vector.load %arg3[%c0, %c0_0] : memref<4x4xf32, #tpu.memory_space<vmem>>, vector<4x4xf32>
    %c0_1 = arith.constant 0 : index
    %c0_2 = arith.constant 0 : index
    %c0_3 = arith.constant 0 : index
    %1 = vector.load %arg5[%c0_1, %c0_2, %c0_3] : memref<1x4x256xf32, #tpu.memory_space<vmem>>, vector<1x4x256xf32>
    %2 = vector.shape_cast %1 : vector<1x4x256xf32> to vector<4x256xf32>
    %cst = arith.constant dense<0.000000e+00> : vector<4x256xf32>
    %3 = tpu.matmul %0, %2, %cst {dimension_numbers = #tpu.dot_dimension_numbers<[1], [0], [0], [1], [0, 0, 1, 1], [], []>} : vector<4x4xf32>, vector<4x256xf32>, vector<4x256xf32> -> vector<4x256xf32>
    %4 = arith.index_cast %arg0 : i32 to index
    %5 = memref.load %arg2[%4] : memref<2xf32, #tpu.memory_space<smem>>
    %c0_4 = arith.constant 0 : index
    %c0_5 = arith.constant 0 : index
    %6 = vector.load %arg4[%c0_4, %c0_5] : memref<4x1xf32, #tpu.memory_space<vmem>>, vector<4x1xf32>
    %7 = vector.broadcast %6 : vector<4x1xf32> to vector<4x256xf32>
    %8 = arith.addf %3, %7 : vector<4x256xf32>
    %9 = vector.broadcast %5 : f32 to vector<4x256xf32>
    %10 = arith.mulf %8, %9 : vector<4x256xf32>
    %c0_6 = arith.constant 0 : index
    %c0_7 = arith.constant 0 : index
    %c0_8 = arith.constant 0 : index
    %11 = vector.load %arg6[%c0_6, %c0_7, %c0_8] : memref<1x4x256xf32, #tpu.memory_space<vmem>>, vector<1x4x256xf32>
    %12 = vector.shape_cast %11 : vector<1x4x256xf32> to vector<4x256xf32>
    %13 = vector.shape_cast %10 : vector<4x256xf32> to vector<1x4x256xf32>
    tpu.vector_store %arg6[%c0_6, %c0_7, %c0_8], %13 {strides = array<i32>} : memref<1x4x256xf32, #tpu.memory_space<vmem>>, vector<1x4x256xf32>,
    return
  }
  func.func @transform_0(%arg0: i32, %arg1: i32, %arg2: memref<2xf32, #tpu.memory_space<smem>>) -> (i32, i32) {
    %c0_i32 = arith.constant 0 : i32
    %c0_i32_0 = arith.constant 0 : i32
    %c0_i32_1 = arith.constant 0 : i32
    return %c0_i32, %c0_i32_0 : i32, i32
  }
  func.func @transform_1(%arg0: i32, %arg1: i32, %arg2: memref<2xf32, #tpu.memory_space<smem>>) -> (i32, i32) {
    %c0_i32 = arith.constant 0 : i32
    %c0_i32_0 = arith.constant 0 : i32
    %c0_i32_1 = arith.constant 0 : i32
    return %c0_i32, %c0_i32_0 : i32, i32
  }
  func.func @transform_2(%arg0: i32, %arg1: i32, %arg2: memref<2xf32, #tpu.memory_space<smem>>) -> (i32, i32, i32) {
    %c0_i32 = arith.constant 0 : i32
    %c0_i32_0 = arith.constant 0 : i32
    return %arg0, %c0_i32, %arg1 : i32, i32, i32
  }
  func.func @transform_3(%arg0: i32, %arg1: i32, %arg2: memref<2xf32, #tpu.memory_space<smem>>) -> (i32, i32, i32) {
    %c0_i32 = arith.constant 0 : i32
    %c0_i32_0 = arith.constant 0 : i32
    return %arg0, %c0_i32, %arg1 : i32, i32, i32
  }
}

</mosaic_0001>

<llo_original>
// kernel: score_model_forward.1
$region0: #{score_model_forward.1}
  #allocation0 [shape = 'u32[]', space=smem, size = 0x4, offset = 0x4, fixed_abs, tag = 'smem constant byte address 0x4 - core index']
  #allocation1 [shape = 'u32[144,128]{1,0:T(1,128)}', space=vmem, size = 0x12000, scoped, tag = 'internal scratch']
  #allocation2 [shape = 's32[1]{0}', space=sflag, size = 0x4, scoped, tag = 'scoped memory for score_model_forward.1']
  #allocation3 [shape = 'u8[512]{0}', space=smem, size = 0x200, scoped, tag = 'prefetched SMEM operand 0']
  %s0 = inlined_call_operand.vmem [shape: f32[2], index: 0, kind: input, shape index: {}]
  %s1 = inlined_call_operand.vmem [shape: f32[4,4], index: 1, kind: input, shape index: {}]
  %s2 = inlined_call_operand.vmem [shape: f32[4,1], index: 2, kind: input, shape index: {}]
  %s3 = inlined_call_operand.vmem [shape: f32[2,4,256], index: 3, kind: input, shape index: {}]
  %s4 = inlined_call_operand.vmem [shape: f32[2,4,256], index: 4, kind: output, shape index: {}]
  %s5 = sld [smem:[#allocation0]]
  $region45: #{score_model_forward.1} parent=0
    _
  %s7 = ssub.s32 1, %s5
  %s8 = scalar_select 0, %s7, %s5
  %s9 = sshll.u32 %s0, 4
  %s10 = int_to_ptr.vmem [resolvable:$true] %s9
  %12 = dma.vmem_to_smem %s10, 16, [#allocation3], [#allocation2]
  %13 = dma.done [#allocation2], 16
  %14 = sfence
  loop: start=0, step=1, limit=4
  $region2: #{score_model_forward.1} parent=0 // loop_pre_header
    _
  $region3: #{score_model_forward.1} parent=0 // loop_header
    %s16 = sphi 0, %s20
    %p17 = scmp.ge.s32.totalorder %s16, 4
    %s23 = sphi 0, %s35
    %s24 = sphi 0, %s31
    %s25 = sphi 0, %s23
    %s26 = sphi 0, %s24
    %s27 = sphi 0, %s25
    %s28 = sphi 0, %s26
    %s36 = sphi 0, %s36
    %s38 = sphi 0, %s36
    %s39 = sphi 0, %s38
    %s53 = sphi 0, %s39
    %s57 = sphi 0, %s57
    %s59 = sphi 0, %s57
    %s60 = sphi 0, %s59
    %s74 = sphi 0, %s60
    %s82 = sphi 0, %s84
    %s85 = sphi 0, %s82
    %s86 = sphi 0, %s85
    %s102 = sphi 0, %s86
    %s110 = sphi 0, %s112
    %s113 = sphi 0, %s110
    %s114 = sphi 0, %s113
    %s130 = sphi 0, %s114
  $region4: #{score_model_forward.1} parent=0 // loop_header_branch
    %19 = sbr.rel (%p17) target = $region8
  $region5: #{score_model_forward.1} parent=0 // loop_body
    %s21 = ssub.s32 %s16, 1
    %s22 = ssub.s32 %s16, 2
    %s29 = sadd.s32 1, %s24
    %p30 = scmp.ge.s32.totalorder %s29, 1
    %s31 = scalar_select %p30, 0, %s29
    %s32 = sadd.s32 1, %s23
    %s33 = scalar_select %p30, %s32, %s23
    %p34 = scmp.ge.s32.totalorder %s33, 2
    %s35 = scalar_select %p34, 0, %s33
    %s37 = sadd.s32 %s36, 1
    %p40 = scmp.eq.s32.totalorder %s16, 1
    %p41 = scmp.ne.s32.totalorder %s36, %s38
    %p42 = scmp.eq.s32.totalorder %s16, 0
    %p43 = por %p41, %p42
    %p44 = scmp.ne.s32.totalorder %s36, %s38
    %p45 = scmp.eq.s32.totalorder %s21, 1
    %p46 = por %p44, %p45
    %p47 = scmp.ne.s32.totalorder %s38, %s39
    %p48 = scmp.eq.s32.totalorder %s21, 0
    %p49 = por %p47, %p48
    %p50 = scmp.ne.s32.totalorder %s38, %s39
    %p51 = scmp.eq.s32.totalorder %s22, 1
    %p52 = por %p50, %p51
    %p54 = scmp.ne.s32.totalorder %s39, %s53
    %p55 = scmp.eq.s32.totalorder %s22, 0
    %p56 = por %p54, %p55
    %s58 = sadd.s32 %s57, 1
    %p61 = scmp.eq.s32.totalorder %s16, 1
    %p62 = scmp.ne.s32.totalorder %s57, %s59
    %p63 = scmp.eq.s32.totalorder %s16, 0
    %p64 = por %p62, %p63
    %p65 = scmp.ne.s32.totalorder %s57, %s59
    %p66 = scmp.eq.s32.totalorder %s21, 1
    %p67 = por %p65, %p66
    %p68 = scmp.ne.s32.totalorder %s59, %s60
    %p69 = scmp.eq.s32.totalorder %s21, 0
    %p70 = por %p68, %p69
    %p71 = scmp.ne.s32.totalorder %s59, %s60
    %p72 = scmp.eq.s32.totalorder %s22, 1
    %p73 = por %p71, %p72
    %p75 = scmp.ne.s32.totalorder %s60, %s74
    %p76 = scmp.eq.s32.totalorder %s22, 0
    %p77 = por %p75, %p76
    %s78 = ssub.s32 %s23, %s35
    %s79 = ssub.s32 %s24, %s31
    %s80 = sor.u32 %s78, %s79
    %p81 = scmp.eq.s32.totalorder %s80, 0
    %s83 = sadd.s32 %s82, 1
    %s84 = scalar_select %p81, %s82, %s83
    %p87 = pneg %p81
    %p88 = scmp.eq.s32.totalorder %s16, 1
    %p89 = por %p87, %p88
    %p90 = scmp.ne.s32.totalorder %s82, %s85
    %p91 = scmp.eq.s32.totalorder %s16, 0
    %p92 = por %p90, %p91
    %p93 = scmp.ne.s32.totalorder %s82, %s85
    %p94 = scmp.eq.s32.totalorder %s21, 1
    %p95 = por %p93, %p94
    %p96 = scmp.ne.s32.totalorder %s85, %s86
    %p97 = scmp.eq.s32.totalorder %s21, 0
    %p98 = por %p96, %p97
    %p99 = scmp.ne.s32.totalorder %s85, %s86
    %p100 = scmp.eq.s32.totalorder %s22, 1
    %p101 = por %p99, %p100
    %p103 = scmp.ne.s32.totalorder %s86, %s102
    %p104 = scmp.eq.s32.totalorder %s22, 0
    %p105 = por %p103, %p104
    %s106 = ssub.s32 %s23, %s35
    %s107 = ssub.s32 %s24, %s31
    %s108 = sor.u32 %s106, %s107
    %p109 = scmp.eq.s32.totalorder %s108, 0
    %s111 = sadd.s32 %s110, 1
    %s112 = scalar_select %p109, %s110, %s111
    %p115 = pneg %p109
    %p116 = scmp.eq.s32.totalorder %s16, 1
    %p117 = por %p115, %p116
    %p118 = scmp.ne.s32.totalorder %s110, %s113
    %p119 = scmp.eq.s32.totalorder %s16, 0
    %p120 = por %p118, %p119
    %p121 = scmp.ne.s32.totalorder %s110, %s113
    %p122 = scmp.eq.s32.totalorder %s21, 1
    %p123 = por %p121, %p122
    %p124 = scmp.ne.s32.totalorder %s113, %s114
    %p125 = scmp.eq.s32.totalorder %s21, 0
    %p126 = por %p124, %p125
    %p127 = scmp.ne.s32.totalorder %s113, %s114
    %p128 = scmp.eq.s32.totalorder %s22, 1
    %p129 = por %p127, %p128
    %p131 = scmp.ne.s32.totalorder %s114, %s130
    %p132 = scmp.eq.s32.totalorder %s22, 0
    %p133 = por %p131, %p132
    %p134 = scmp.le.s32.totalorder 1, %s16
    %p135 = scmp.lt.s32.totalorder %s16, 3
    %p136 = pnand %p134, %p135
    %p137 = pneg %p136
    // Predicated region
    $region9: #{score_model_forward.1} parent=5 // pred_check
      _
    $region10: #{score_model_forward.1} parent=5 // pred_check_branch
      %139 = sbr.rel (%p136) target = $region12
    $region11: #{score_model_forward.1} parent=5 // pred_region
      %s140 = ssub.s32 %s16, 1
      // Predicated region
      $region13: #{score_model_forward.1} parent=11 // pred_check
        %p141 = pneg %p49
      $region14: #{score_model_forward.1} parent=11 // pred_check_branch
        %143 = sbr.rel (%p141) target = $region16
      $region15: #{score_model_forward.1} parent=11 // pred_region
        _
      $region16: #{score_model_forward.1} parent=11 // pred_fallthru
        _
      // Predicated region
      $region17: #{score_model_forward.1} parent=11 // pred_check
        %p144 = pneg %p70
      $region18: #{score_model_forward.1} parent=11 // pred_check_branch
        %146 = sbr.rel (%p144) target = $region20
      $region19: #{score_model_forward.1} parent=11 // pred_region
        _
      $region20: #{score_model_forward.1} parent=11 // pred_fallthru
        _
    $region12: #{score_model_forward.1} parent=5 // pred_fallthru
      _
    %p147 = scmp.lt.s32.totalorder %s16, 2
    // Predicated region
    $region21: #{score_model_forward.1} parent=5 // pred_check
      %p148 = pneg %p147
    $region22: #{score_model_forward.1} parent=5 // pred_check_branch
      %150 = sbr.rel (%p148) target = $region24
    $region23: #{score_model_forward.1} parent=5 // pred_region
      // Predicated region
      $region25: #{score_model_forward.1} parent=23 // pred_check
        %p151 = pneg %p92
      $region26: #{score_model_forward.1} parent=23 // pred_check_branch
        %153 = sbr.rel (%p151) target = $region28
      $region27: #{score_model_forward.1} parent=23 // pred_region
        %s154 = smul.u32 2, %s24
        %p155 = scmp.lt.s32.totalorder %s23, 1
        %s156 = scalar_select %p155, %s23, 1
        %p157 = scmp.lt.s32.totalorder %s154, 1
        %s158 = scalar_select %p157, %s154, 1
        %s159 = smul.addr %s156, 2
        %s160 = sadd.s32 %s158, %s159
        %s161 = smul.addr %s160, 4
        %s162 = scalar_lea.vmem %s3, %s161
        %s163 = smul.u32 2, %s24
      $region28: #{score_model_forward.1} parent=23 // pred_fallthru
        _
    $region24: #{score_model_forward.1} parent=5 // pred_fallthru
      _
    %p164 = scmp.le.s32.totalorder 1, %s16
    %p165 = scmp.lt.s32.totalorder %s16, 3
    %p166 = pnand %p164, %p165
    %p167 = pneg %p166
    // Predicated region
    $region29: #{score_model_forward.1} parent=5 // pred_check
      _
    $region30: #{score_model_forward.1} parent=5 // pred_check_branch
      %169 = sbr.rel (%p166) target = $region32
    $region31: #{score_model_forward.1} parent=5 // pred_region
      %s170 = ssub.s32 %s16, 1
      %p171 = pneg %p49
      %p172 = pneg %p46
      %p173 = pneg %p70
      %p174 = pneg %p67
      %s175 = smul.u32 2, %s26
      %p176 = scmp.lt.s32.totalorder %s25, 1
      %s177 = scalar_select %p176, %s25, 1
      %p178 = scmp.lt.s32.totalorder %s175, 1
      %s179 = scalar_select %p178, %s175, 1
      %s180 = smul.addr %s177, 2
      %s181 = sadd.s32 %s179, %s180
      %s182 = smul.addr %s181, 4
      %s183 = scalar_lea.vmem %s3, %s182
      %p184 = pneg %p98
      %p185 = pneg %p95
      %p186 = pneg %p126
      %p187 = pneg %p123
      %s188 = smul.u32 2, %s26
      %p189 = scmp.lt.s32.totalorder %s25, 1
      %s190 = scalar_select %p189, %s25, 1
      %p191 = scmp.lt.s32.totalorder %s188, 1
      %s192 = scalar_select %p191, %s188, 1
      %s193 = smul.addr %s190, 2
      %s194 = sadd.s32 %s192, %s193
      %s195 = smul.addr %s194, 4
      %s196 = scalar_lea.vmem %s4, %s195
      %s197 = smul.u32 2, %s26
      %p198 = scmp.lt.s32.totalorder %s25, 1
      %s199 = scalar_select %p198, %s25, 1
      %p200 = scmp.lt.s32.totalorder %s197, 1
      %s201 = scalar_select %p200, %s197, 1
      %s202 = smul.addr %s199, 2
      %s203 = sadd.s32 %s201, %s202
      %s204 = smul.addr %s203, 4
      %s205 = scalar_lea.vmem %s3, %s204
      %s206 = smul.u32 2, %s26
      %s207 = smul.u32 2, %s26
      %p208 = scmp.lt.s32.totalorder %s25, 1
      %s209 = scalar_select %p208, %s25, 1
      %p210 = scmp.lt.s32.totalorder %s207, 1
      %s211 = scalar_select %p210, %s207, 1
      %s212 = smul.addr %s209, 2
      %s213 = sadd.s32 %s211, %s212
      %s214 = smul.addr %s213, 4
      %s215 = scalar_lea.vmem %s4, %s214
      %s216 = smul.u32 2, %s26
      %v217 = vld [vmem:[%s1] sm:$0xf]
      %v218 = vld [vmem:[%s205] sm:$0xff]
      %s219 = sld [smem:[#allocation3 + %s25]]
      %v220 = vld [vmem:[%s2] sm:$0xf]
      %222 = vset.pattern.permute.xlu0 0
      %223 = vperm.xlu0 %222, %v220
      %v224 = vpop.permute.xlu0 %223
      %v227 = vcombine.high %v218, %v218
      %vm228 = vcmask 31744
      %v230 = vsel %vm228, %v217, 0
      %vm232 = vcmask 1043456
      %v233 = vsel %vm232, %v218, 0
      %v235 = vsel %vm232, %v227, 0
      %237 = vmatprep.subr.mxu0 0.0
      %238 = vmatpush1.msra.mxu0 0.0
      %239 = vmatprep.subr.mxu0 0.0
      %240 = vmatpush1.msra.mxu0 0.0
      %241 = vmatprep.subr.mxu0 0.0
      %242 = vmatpush1.msra.mxu0 0.0
      %243 = vmatprep.subr.mxu0 0.0
      %244 = vmatpush1.msra.mxu0 0.0
      %245 = vmatprep.subr.mxu0 0.0
      %246 = vmatpush1.msra.mxu0 0.0
      %247 = vmatprep.subr.mxu0 0.0
      %248 = vmatpush1.msra.mxu0 0.0
      %249 = vmatprep.subr.mxu0 0.0
      %250 = vmatpush1.msra.mxu0 0.0
      %251 = vmatprep.subr.mxu0 0.0
      %252 = vmatpush1.msra.mxu0 0.0
      %253 = vmatprep.subr.mxu0 0.0
      %254 = vmatpush1.msra.mxu0 0.0
      %255 = vmatprep.subr.mxu0 0.0
      %256 = vmatpush1.msra.mxu0 0.0
      %257 = vmatprep.subr.mxu0 0.0
      %258 = vmatpush1.msra.mxu0 0.0
      %259 = vmatprep.subr.mxu0 0.0
      %260 = vmatpush1.msra.mxu0 0.0
      %261 = vmatprep.subr.mxu0 0.0
      %262 = vmatpush1.msra.mxu0 0.0
      %263 = vmatprep.subr.mxu0 0.0
      %264 = vmatpush1.msra.mxu0 0.0
      %265 = vmatprep.subr.mxu0 0.0
      %266 = vmatpush1.msra.mxu0 0.0
      %267 = vmatprep.subr.mxu0 %v235
      %268 = vmatpush1.msra.mxu0 %v233
      %269 = vmatprep.subr.mxu0 0.0
      %270 = vmatpush2.msra.mxu0 0.0
      %271 = vmatprep.subr.mxu0 0.0
      %272 = vmatpush2.msra.mxu0 0.0
      %273 = vmatprep.subr.mxu0 0.0
      %274 = vmatpush2.msra.mxu0 0.0
      %275 = vmatprep.subr.mxu0 0.0
      %276 = vmatpush2.msra.mxu0 0.0
      %277 = vmatprep.subr.mxu0 0.0
      %278 = vmatpush2.msra.mxu0 0.0
      %279 = vmatprep.subr.mxu0 0.0
      %280 = vmatpush2.msra.mxu0 0.0
      %281 = vmatprep.subr.mxu0 0.0
      %282 = vmatpush2.msra.mxu0 0.0
      %283 = vmatprep.subr.mxu0 0.0
      %284 = vmatpush2.msra.mxu0 0.0
      %285 = vmatprep.subr.mxu0 0.0
      %286 = vmatpush2.msra.mxu0 0.0
      %287 = vmatprep.subr.mxu0 0.0
      %288 = vmatpush2.msra.mxu0 0.0
      %289 = vmatprep.subr.mxu0 0.0
      %290 = vmatpush2.msra.mxu0 0.0
      %291 = vmatprep.subr.mxu0 0.0
      %292 = vmatpush2.msra.mxu0 0.0
      %293 = vmatprep.subr.mxu0 0.0
      %294 = vmatpush2.msra.mxu0 0.0
      %295 = vmatprep.subr.mxu0 0.0
      %296 = vmatpush2.msra.mxu0 0.0
      %297 = vmatprep.subr.mxu0 0.0
      %298 = vmatpush2.msra.mxu0 0.0
      %299 = vmatprep.subr.mxu0 0.0
      %300 = vmatpush2.msra.mxu0 0.0
      %301 = vmatprep.mubr.f32.mxu0 0.0
      %302 = vmatmul.mubr.f32.gmra.mxu0 %v230
      %v303 = vpop.f32.mrf.mxu0
      %v304 = vadd.f32 %v224, %v303
      %v305 = vpop.f32.mrf.mxu0
      %v306 = vadd.f32 %v224, %v305
      %307 = vdwg.mxu0
      %v308 = vstv %s219
      %v309 = vmul.f32 %v304, %v308
      %v310 = vmul.f32 %v306, %v308
      %v313 = vcombine.low %v309, %v310
      %315 = vst [vmem:[%s215] sm:$0xff] %v313
      %s316 = smul.u32 2, %s26
      %p317 = scmp.lt.s32.totalorder %s25, 1
      %s318 = scalar_select %p317, %s25, 1
      %p319 = scmp.lt.s32.totalorder %s316, 1
      %s320 = scalar_select %p319, %s316, 1
      %s321 = smul.addr %s318, 2
      %s322 = sadd.s32 %s320, %s321
      %s323 = smul.addr %s322, 4
      %s324 = scalar_lea.vmem %s4, %s323
      // Predicated region
      $region33: #{score_model_forward.1} parent=31 // pred_check
        %p325 = pneg %p123
      $region34: #{score_model_forward.1} parent=31 // pred_check_branch
        %327 = sbr.rel (%p325) target = $region36
      $region35: #{score_model_forward.1} parent=31 // pred_region
        %s328 = smul.u32 2, %s26
      $region36: #{score_model_forward.1} parent=31 // pred_fallthru
        _
    $region32: #{score_model_forward.1} parent=5 // pred_fallthru
      _
    %p329 = scmp.le.s32.totalorder 2, %s16
    // Predicated region
    $region37: #{score_model_forward.1} parent=5 // pred_check
      %p330 = pneg %p329
    $region38: #{score_model_forward.1} parent=5 // pred_check_branch
      %332 = sbr.rel (%p330) target = $region40
    $region39: #{score_model_forward.1} parent=5 // pred_region
      %s333 = ssub.s32 %s16, 2
      // Predicated region
      $region41: #{score_model_forward.1} parent=39 // pred_check
        %p334 = pneg %p129
      $region42: #{score_model_forward.1} parent=39 // pred_check_branch
        %336 = sbr.rel (%p334) target = $region44
      $region43: #{score_model_forward.1} parent=39 // pred_region
        %s337 = smul.u32 2, %s28
        %p338 = scmp.lt.s32.totalorder %s27, 1
        %s339 = scalar_select %p338, %s27, 1
        %p340 = scmp.lt.s32.totalorder %s337, 1
        %s341 = scalar_select %p340, %s337, 1
        %s342 = smul.addr %s339, 2
        %s343 = sadd.s32 %s341, %s342
        %s344 = smul.addr %s343, 4
        %s345 = scalar_lea.vmem %s4, %s344
      $region44: #{score_model_forward.1} parent=39 // pred_fallthru
        _
    $region40: #{score_model_forward.1} parent=5 // pred_fallthru
      _
  $region6: #{score_model_forward.1} parent=0 // loop_footer
    %s20 = sadd.s32 1, %s16
  $region7: #{score_model_forward.1} parent=0 // loop_footer_branch
    %15 = sbr.rel target = $region3
  $region8: #{score_model_forward.1} parent=0 // loop_exit
    _

</llo_original>
